<compile_context>
chip_gen: v7x
topology: tpu7x:2x2x1
jax: 0.10.0
libtpu: 0.0.40
codegen_flags: <defaults>
</compile_context>

<pallas_src>
import functools

import jax
import jax.numpy as jnp
from jax.experimental import pallas as pl
from jax.experimental.pallas import tpu as pltpu

BN_EPS = 1e-5      # torch.nn.BatchNorm1d default eps
NORM_EPS = 1e-12   # torch.nn.functional.normalize default eps


# ---------------------------------------------------------------------------
# Single fused kernel: per-view projector (Linear -> BN(train) -> ReLU ->
# Linear -> L2-normalize) + supervised-contrastive loss over both views.
# ---------------------------------------------------------------------------
def _wcl_fused_kernel(xa_ref, xb_ref, w1_ref, w2_ref, p_ref, labr_ref, labc_ref,
                      o_ref, *, inv_tem):
    n_b = xa_ref.shape[0]

    # Parameters: one full-tile load, then value indexing.
    p = p_ref[...]                                     # (4, Hp) f32
    b1, gamma, beta, b2 = p[0:1, :], p[1:2, :], p[2:3, :], p[3:4, :]
    w1 = w1_ref[...]                                   # (F , Hp) bf16
    w2 = w2_ref[...]                                   # (Hp, Hp) bf16

    # Positive-pair mask built in-kernel from labels (cheap VPU compare;
    # no (B,B) HBM traffic or resident wrapper mask).
    same = labc_ref[...] == labr_ref[...]              # (B,B) bool
    row = jax.lax.broadcasted_iota(jnp.int32, (n_b, n_b), 0)
    col = jax.lax.broadcasted_iota(jnp.int32, (n_b, n_b), 1)
    off = row != col                                   # off-diagonal mask
    pos_mask = jnp.where(jnp.logical_and(same, off), 1.0, 0.0)   # f32 (B,B)
    # Exact reciprocal: a (B,1) op, nowhere near the critical unit.
    # NOTE: rows whose label is unique give 1/0 = inf -> NaN, same hazard as
    # the PyTorch reference.
    inv_pos_cnt = 1.0 / jnp.sum(pos_mask, axis=1, keepdims=True)

    # sqrt(1/tem) folded into the L2 normalize so v @ v.T already carries /tem.
    norm_scale = inv_tem ** 0.5

    def view_mean_log_prob_pos(x_ref):
        x = x_ref[...]                                             # (B,F) bf16
        # Linear 1 — bf16 MXU feed, f32 accumulate.
        h = jnp.dot(x, w1, preferred_element_type=jnp.float32) + b1
        # BatchNorm1d (training mode): this view's own batch statistics
        # (biased variance), exactly as two separate projector() calls.
        mu = jnp.mean(h, axis=0, keepdims=True)
        var = jnp.mean(jnp.square(h - mu), axis=0, keepdims=True)
        hn = (h - mu) * jax.lax.rsqrt(var + BN_EPS) * gamma + beta
        hr = jnp.maximum(hn, 0.0).astype(jnp.bfloat16)             # ReLU
        # Linear 2 — bf16 MXU feed, f32 accumulate.
        o = jnp.dot(hr, w2, preferred_element_type=jnp.float32) + b2
        # Row-wise L2 normalize with the temperature folded into the scale.
        ss = jnp.sum(o * o, axis=1, keepdims=True)
        v = (o * (jax.lax.rsqrt(jnp.maximum(ss, NORM_EPS * NORM_EPS))
                  * norm_scale)).astype(jnp.bfloat16)
        # logits = (v v^T) / tem via dot_general contracting the last dims
        # (no transposed copy).
        logits = jax.lax.dot_general(v, v, (((1,), (1,)), ((), ())),
                                     preferred_element_type=jnp.float32)
        # Rows are L2-normalized: the row max is the diagonal == 1/tem, so the
        # safe-softmax shift is a constant (no (B,B) cross-lane max reduce).
        z = logits - inv_tem
        denom = jnp.sum(jnp.where(off, jnp.exp(z), 0.0),
                        axis=1, keepdims=True)
        log_prob = z - jnp.log(denom)
        return jnp.sum(pos_mask * log_prob, axis=1, keepdims=True) * inv_pos_cnt

    m = view_mean_log_prob_pos(xa_ref) + view_mean_log_prob_pos(xb_ref)
    # mean over batch, average of the two views, negated — scalar via SMEM.
    o_ref[0] = jnp.sum(m) * (-0.5 / n_b)


# ---------------------------------------------------------------------------
# Wrapper: lane-pad the hidden width, pack the tiny param vectors, cast the
# MXU operands to bf16, and launch the single fused kernel.
# ---------------------------------------------------------------------------
@functools.partial(jax.jit, static_argnames=("tem",))
def wcl_forward(doc_fea, doc_fea_svd, pro, labels, params, tem=0.5):
    del pro  # normalized in the reference forward but unused by the loss
    w1, b1, gamma, beta, w2, b2 = params
    B, F = doc_fea.shape
    H = w2.shape[1]
    Hp = ((H + 127) // 128) * 128          # lane-pad hidden width to 128k

    def pad_cols(a):                       # zero-pad trailing hidden columns
        return jnp.pad(a.astype(jnp.float32), ((0, 0), (0, Hp - H)))

    # bf16 MXU feed (halves x / weight DMA bytes; every dot accumulates f32).
    # Ideally the caller stores these in bf16 in HBM already.
    xa = doc_fea.astype(jnp.bfloat16)                                # (B, F)
    xb = doc_fea_svd.astype(jnp.bfloat16)                            # (B, F)
    w1p = pad_cols(w1).astype(jnp.bfloat16)                          # (F, Hp)
    w2p = jnp.pad(w2.astype(jnp.float32),
                  ((0, Hp - H), (0, Hp - H))).astype(jnp.bfloat16)   # (Hp, Hp)
    # Zero padding keeps BN, ReLU, the L2 norm and the logits unchanged.
    p_packed = jnp.concatenate(
        [pad_cols(b1.reshape(1, H)), pad_cols(gamma.reshape(1, H)),
         pad_cols(beta.reshape(1, H)), pad_cols(b2.reshape(1, H))],
        axis=0)                                                      # (4, Hp) f32

    lab = labels.astype(jnp.int32)
    lab_row = lab.reshape(1, B)            # (1, B)
    lab_col = lab.reshape(B, 1)            # (B, 1)

    vmem = pl.BlockSpec(memory_space=pltpu.MemorySpace.VMEM)
    smem = pl.BlockSpec(memory_space=pltpu.MemorySpace.SMEM)

    loss = pl.pallas_call(
        functools.partial(_wcl_fused_kernel, inv_tem=float(1.0 / tem)),
        out_shape=jax.ShapeDtypeStruct((1,), jnp.float32),
        in_specs=[vmem, vmem, vmem, vmem, vmem, vmem, vmem],
        out_specs=smem,
    )(xa, xb, w1p, w2p, p_packed, lab_row, lab_col)
    return loss[0]

# TODO(synk): share=False branch (scipy csr_matrix + connected_components on
# host) and the BatchNorm running_mean/running_var in-place updates have no
# clean Pallas equivalent; only the default share=True loss path is covered.
# TODO(synk): at production B, tile the (B,B) loss over query-row blocks with
# a running log-sum-exp (grid + BlockSpec), mark the view/row axis "parallel"
# for v7x's second TensorCore, and size vmem_limit_bytes to the resident
# buffers (v5e scoped default is only 16 MiB). Untiled is fine at demo B.


# ---------------------------------------------------------------------------
# Pure-JAX float32 reference (module semantics) for the correctness check.
# ---------------------------------------------------------------------------
def _ref_forward(doc_fea, doc_fea_svd, labels, params, tem):
    w1, b1, g, bt, w2, b2 = params

    def proj(x):
        h = x @ w1 + b1
        mu = h.mean(0, keepdims=True)
        var = ((h - mu) ** 2).mean(0, keepdims=True)
        hn = (h - mu) / jnp.sqrt(var + BN_EPS) * g + bt
        o = jnp.maximum(hn, 0.0) @ w2 + b2
        n = jnp.sqrt((o * o).sum(1, keepdims=True))
        return o / jnp.maximum(n, NORM_EPS)

    o1, o2 = proj(doc_fea), proj(doc_fea_svd)
    B = o1.shape[0]
    mask = (labels[:, None] == labels[None, :]).astype(jnp.float32)
    off = 1.0 - jnp.eye(B, dtype=jnp.float32)

    def sc(o):
        logits = o @ o.T / tem
        m = mask * off
        el = jnp.exp(logits) * off
        lp = logits - jnp.log(el.sum(1, keepdims=True))
        mlpp = (m * lp).sum(1) / m.sum(1)
        return (-mlpp).mean()

    return (sc(o1) + sc(o2)) / 2.0


if __name__ == "__main__":
    B, IN_FEA, HID_FEA = 8, 32, 32
    TEM = 0.5

    key = jax.random.PRNGKey(0)
    ks = jax.random.split(key, 8)

    # Deterministic parameter init (shapes from the module's __init__).
    w1 = jax.random.normal(ks[0], (IN_FEA, HID_FEA), jnp.float32) * 0.1
    b1 = jax.random.normal(ks[1], (1, HID_FEA), jnp.float32) * 0.05
    gamma = jnp.ones((1, HID_FEA), jnp.float32)
    beta = jnp.zeros((1, HID_FEA), jnp.float32)
    w2 = jax.random.normal(ks[2], (HID_FEA, HID_FEA), jnp.float32) * 0.1
    b2 = jax.random.normal(ks[3], (1, HID_FEA), jnp.float32) * 0.05
    params = (w1, b1, gamma, beta, w2, b2)

    # Inputs.
    doc_fea = jax.random.normal(ks[4], (B, IN_FEA), jnp.float32)
    doc_fea_svd = jax.random.normal(ks[5], (B, IN_FEA), jnp.float32)
    pro = jax.random.normal(ks[6], (B, HID_FEA), jnp.float32)
    # Each label appears at least twice so mask.sum(1) > 0 off-diagonal.
    labels = jnp.array([0, 0, 1, 1, 2, 2, 3, 3], dtype=jnp.int32)

    loss = wcl_forward(doc_fea, doc_fea_svd, pro, labels, params, tem=TEM)
    loss = jax.block_until_ready(loss)

    ref = _ref_forward(doc_fea, doc_fea_svd, labels, params, TEM)
    # bf16 MXU feed introduces ~0.1-0.5% relative error vs. the f32 reference.
    assert bool(jnp.isfinite(loss)), "loss is not finite"
    assert bool(jnp.allclose(loss, ref, rtol=1e-2, atol=1e-2)), (loss, ref)

    print("KERNEL_OK")
</pallas_src>

<mosaic_0001>
module attributes {stable_mosaic.version = 11 : i64} {
  func.func @_wcl_fused_kernel(%arg0: memref<8x32xbf16, #tpu.memory_space<vmem>>, %arg1: memref<8x32xbf16, #tpu.memory_space<vmem>>, %arg2: memref<32x128xbf16, #tpu.memory_space<vmem>>, %arg3: memref<128x128xbf16, #tpu.memory_space<vmem>>, %arg4: memref<4x128xf32, #tpu.memory_space<vmem>>, %arg5: memref<1x8xi32, #tpu.memory_space<vmem>>, %arg6: memref<8x1xi32, #tpu.memory_space<vmem>>, %arg7: memref<1xf32, #tpu.memory_space<smem>>) attributes {dimension_semantics = [], scalar_prefetch = 0 : i64, scratch_operands = 0 : i64, tpu.core_type = #tpu.core_type<tc>} {
    %c0 = arith.constant 0 : index
    %c0_0 = arith.constant 0 : index
    %0 = vector.load %arg4[%c0, %c0_0] : memref<4x128xf32, #tpu.memory_space<vmem>>, vector<4x128xf32>
    %1 = vector.extract_strided_slice %0 {offsets = [0, 0], sizes = [1, 128], strides = [1, 1]} : vector<4x128xf32> to vector<1x128xf32>
    %2 = vector.extract_strided_slice %0 {offsets = [1, 0], sizes = [1, 128], strides = [1, 1]} : vector<4x128xf32> to vector<1x128xf32>
    %3 = vector.extract_strided_slice %0 {offsets = [2, 0], sizes = [1, 128], strides = [1, 1]} : vector<4x128xf32> to vector<1x128xf32>
    %4 = vector.extract_strided_slice %0 {offsets = [3, 0], sizes = [1, 128], strides = [1, 1]} : vector<4x128xf32> to vector<1x128xf32>
    %c0_1 = arith.constant 0 : index
    %c0_2 = arith.constant 0 : index
    %5 = vector.load %arg2[%c0_1, %c0_2] : memref<32x128xbf16, #tpu.memory_space<vmem>>, vector<32x128xbf16>
    %c0_3 = arith.constant 0 : index
    %c0_4 = arith.constant 0 : index
    %6 = vector.load %arg3[%c0_3, %c0_4] : memref<128x128xbf16, #tpu.memory_space<vmem>>, vector<128x128xbf16>
    %c0_5 = arith.constant 0 : index
    %c0_6 = arith.constant 0 : index
    %7 = vector.load %arg6[%c0_5, %c0_6] : memref<8x1xi32, #tpu.memory_space<vmem>>, vector<8x1xi32>
    %c0_7 = arith.constant 0 : index
    %c0_8 = arith.constant 0 : index
    %8 = vector.load %arg5[%c0_7, %c0_8] : memref<1x8xi32, #tpu.memory_space<vmem>>, vector<1x8xi32>
    %9 = vector.broadcast %7 : vector<8x1xi32> to vector<8x8xi32>
    %10 = vector.broadcast %8 : vector<1x8xi32> to vector<8x8xi32>
    %11 = arith.cmpi eq, %9, %10 : vector<8x8xi32>
    %12 = tpu.iota {dimensions = array<i32: 0>} : vector<8x8xi32>
    %13 = tpu.iota {dimensions = array<i32: 1>} : vector<8x8xi32>
    %14 = arith.cmpi ne, %12, %13 : vector<8x8xi32>
    %15 = arith.andi %11, %14 : vector<8x8xi1>
    %cst = arith.constant 1.000000e+00 : f32
    %cst_9 = arith.constant 0.000000e+00 : f32
    %16 = vector.broadcast %cst : f32 to vector<8x8xf32>
    %17 = vector.broadcast %cst_9 : f32 to vector<8x8xf32>
    %18 = arith.select %15, %16, %17 : vector<8x8xi1>, vector<8x8xf32>
    %cst_10 = arith.constant dense<0.000000e+00> : vector<8xf32>
    %19 = vector.multi_reduction <add>, %18, %cst_10 [1] : vector<8x8xf32> to vector<8xf32>
    %20 = vector.shape_cast %19 : vector<8xf32> to vector<8x1xf32>
    %cst_11 = arith.constant 1.000000e+00 : f32
    %21 = vector.broadcast %cst_11 : f32 to vector<8x1xf32>
    %22 = arith.divf %21, %20 : vector<8x1xf32>
    %c0_12 = arith.constant 0 : index
    %c0_13 = arith.constant 0 : index
    %23 = vector.load %arg0[%c0_12, %c0_13] : memref<8x32xbf16, #tpu.memory_space<vmem>>, vector<8x32xbf16>
    %cst_14 = arith.constant dense<0.000000e+00> : vector<8x128xf32>
    %24 = tpu.matmul %23, %5, %cst_14 {dimension_numbers = #tpu.dot_dimension_numbers<[1], [0], [0], [1], [0, 0, 1, 1], [], []>} : vector<8x32xbf16>, vector<32x128xbf16>, vector<8x128xf32> -> vector<8x128xf32>
    %25 = vector.broadcast %1 : vector<1x128xf32> to vector<8x128xf32>
    %26 = arith.addf %24, %25 : vector<8x128xf32>
    %cst_15 = arith.constant dense<0.000000e+00> : vector<128xf32>
    %27 = vector.multi_reduction <add>, %26, %cst_15 [0] : vector<8x128xf32> to vector<128xf32>
    %28 = vector.shape_cast %27 : vector<128xf32> to vector<1x128xf32>
    %cst_16 = arith.constant 8.000000e+00 : f32
    %29 = vector.broadcast %cst_16 : f32 to vector<1x128xf32>
    %30 = arith.divf %28, %29 : vector<1x128xf32>
    %31 = vector.broadcast %30 : vector<1x128xf32> to vector<8x128xf32>
    %32 = arith.subf %26, %31 : vector<8x128xf32>
    %33 = arith.mulf %32, %32 : vector<8x128xf32>
    %cst_17 = arith.constant dense<0.000000e+00> : vector<128xf32>
    %34 = vector.multi_reduction <add>, %33, %cst_17 [0] : vector<8x128xf32> to vector<128xf32>
    %35 = vector.shape_cast %34 : vector<128xf32> to vector<1x128xf32>
    %cst_18 = arith.constant 8.000000e+00 : f32
    %36 = vector.broadcast %cst_18 : f32 to vector<1x128xf32>
    %37 = arith.divf %35, %36 : vector<1x128xf32>
    %38 = vector.broadcast %30 : vector<1x128xf32> to vector<8x128xf32>
    %39 = arith.subf %26, %38 : vector<8x128xf32>
    %cst_19 = arith.constant 9.99999974E-6 : f32
    %40 = vector.broadcast %cst_19 : f32 to vector<1x128xf32>
    %41 = arith.addf %37, %40 : vector<1x128xf32>
    %42 = math.rsqrt %41 : vector<1x128xf32>
    %43 = vector.broadcast %42 : vector<1x128xf32> to vector<8x128xf32>
    %44 = arith.mulf %39, %43 : vector<8x128xf32>
    %45 = vector.broadcast %2 : vector<1x128xf32> to vector<8x128xf32>
    %46 = arith.mulf %44, %45 : vector<8x128xf32>
    %47 = vector.broadcast %3 : vector<1x128xf32> to vector<8x128xf32>
    %48 = arith.addf %46, %47 : vector<8x128xf32>
    %cst_20 = arith.constant 0.000000e+00 : f32
    %49 = vector.broadcast %cst_20 : f32 to vector<8x128xf32>
    %50 = arith.maximumf %48, %49 : vector<8x128xf32>
    %51 = arith.truncf %50 : vector<8x128xf32> to vector<8x128xbf16>
    %cst_21 = arith.constant dense<0.000000e+00> : vector<8x128xf32>
    %52 = tpu.matmul %51, %6, %cst_21 {dimension_numbers = #tpu.dot_dimension_numbers<[1], [0], [0], [1], [0, 0, 1, 1], [], []>} : vector<8x128xbf16>, vector<128x128xbf16>, vector<8x128xf32> -> vector<8x128xf32>
    %53 = vector.broadcast %4 : vector<1x128xf32> to vector<8x128xf32>
    %54 = arith.addf %52, %53 : vector<8x128xf32>
    %55 = arith.mulf %54, %54 : vector<8x128xf32>
    %cst_22 = arith.constant dense<0.000000e+00> : vector<8xf32>
    %56 = vector.multi_reduction <add>, %55, %cst_22 [1] : vector<8x128xf32> to vector<8xf32>
    %57 = vector.shape_cast %56 : vector<8xf32> to vector<8x1xf32>
    %cst_23 = arith.constant 1.000000e-24 : f32
    %58 = vector.broadcast %cst_23 : f32 to vector<8x1xf32>
    %59 = arith.maximumf %57, %58 : vector<8x1xf32>
    %60 = math.rsqrt %59 : vector<8x1xf32>
    %cst_24 = arith.constant 1.41421354 : f32
    %61 = vector.broadcast %cst_24 : f32 to vector<8x1xf32>
    %62 = arith.mulf %60, %61 : vector<8x1xf32>
    %63 = vector.broadcast %62 : vector<8x1xf32> to vector<8x128xf32>
    %64 = arith.mulf %54, %63 : vector<8x128xf32>
    %65 = arith.truncf %64 : vector<8x128xf32> to vector<8x128xbf16>
    %cst_25 = arith.constant dense<0.000000e+00> : vector<8x8xf32>
    %66 = tpu.matmul %65, %65, %cst_25 {dimension_numbers = #tpu.dot_dimension_numbers<[1], [1], [0], [0], [0, 0, 1, 0], [], []>} : vector<8x128xbf16>, vector<8x128xbf16>, vector<8x8xf32> -> vector<8x8xf32>
    %cst_26 = arith.constant 2.000000e+00 : f32
    %67 = vector.broadcast %cst_26 : f32 to vector<8x8xf32>
    %68 = arith.subf %66, %67 : vector<8x8xf32>
    %69 = math.exp %68 : vector<8x8xf32>
    %cst_27 = arith.constant 0.000000e+00 : f32
    %70 = vector.broadcast %cst_27 : f32 to vector<8x8xf32>
    %71 = arith.select %14, %69, %70 : vector<8x8xi1>, vector<8x8xf32>
    %cst_28 = arith.constant dense<0.000000e+00> : vector<8xf32>
    %72 = vector.multi_reduction <add>, %71, %cst_28 [1] : vector<8x8xf32> to vector<8xf32>
    %73 = vector.shape_cast %72 : vector<8xf32> to vector<8x1xf32>
    %74 = math.log %73 : vector<8x1xf32>
    %75 = vector.broadcast %74 : vector<8x1xf32> to vector<8x8xf32>
    %76 = arith.subf %68, %75 : vector<8x8xf32>
    %77 = arith.mulf %18, %76 : vector<8x8xf32>
    %cst_29 = arith.constant dense<0.000000e+00> : vector<8xf32>
    %78 = vector.multi_reduction <add>, %77, %cst_29 [1] : vector<8x8xf32> to vector<8xf32>
    %79 = vector.shape_cast %78 : vector<8xf32> to vector<8x1xf32>
    %80 = arith.mulf %79, %22 : vector<8x1xf32>
    %c0_30 = arith.constant 0 : index
    %c0_31 = arith.constant 0 : index
    %81 = vector.load %arg1[%c0_30, %c0_31] : memref<8x32xbf16, #tpu.memory_space<vmem>>, vector<8x32xbf16>
    %cst_32 = arith.constant dense<0.000000e+00> : vector<8x128xf32>
    %82 = tpu.matmul %81, %5, %cst_32 {dimension_numbers = #tpu.dot_dimension_numbers<[1], [0], [0], [1], [0, 0, 1, 1], [], []>} : vector<8x32xbf16>, vector<32x128xbf16>, vector<8x128xf32> -> vector<8x128xf32>
    %83 = vector.broadcast %1 : vector<1x128xf32> to vector<8x128xf32>
    %84 = arith.addf %82, %83 : vector<8x128xf32>
    %cst_33 = arith.constant dense<0.000000e+00> : vector<128xf32>
    %85 = vector.multi_reduction <add>, %84, %cst_33 [0] : vector<8x128xf32> to vector<128xf32>
    %86 = vector.shape_cast %85 : vector<128xf32> to vector<1x128xf32>
    %cst_34 = arith.constant 8.000000e+00 : f32
    %87 = vector.broadcast %cst_34 : f32 to vector<1x128xf32>
    %88 = arith.divf %86, %87 : vector<1x128xf32>
    %89 = vector.broadcast %88 : vector<1x128xf32> to vector<8x128xf32>
    %90 = arith.subf %84, %89 : vector<8x128xf32>
    %91 = arith.mulf %90, %90 : vector<8x128xf32>
    %cst_35 = arith.constant dense<0.000000e+00> : vector<128xf32>
    %92 = vector.multi_reduction <add>, %91, %cst_35 [0] : vector<8x128xf32> to vector<128xf32>
    %93 = vector.shape_cast %92 : vector<128xf32> to vector<1x128xf32>
    %cst_36 = arith.constant 8.000000e+00 : f32
    %94 = vector.broadcast %cst_36 : f32 to vector<1x128xf32>
    %95 = arith.divf %93, %94 : vector<1x128xf32>
    %96 = vector.broadcast %88 : vector<1x128xf32> to vector<8x128xf32>
    %97 = arith.subf %84, %96 : vector<8x128xf32>
    %cst_37 = arith.constant 9.99999974E-6 : f32
    %98 = vector.broadcast %cst_37 : f32 to vector<1x128xf32>
    %99 = arith.addf %95, %98 : vector<1x128xf32>
    %100 = math.rsqrt %99 : vector<1x128xf32>
    %101 = vector.broadcast %100 : vector<1x128xf32> to vector<8x128xf32>
    %102 = arith.mulf %97, %101 : vector<8x128xf32>
    %103 = vector.broadcast %2 : vector<1x128xf32> to vector<8x128xf32>
    %104 = arith.mulf %102, %103 : vector<8x128xf32>
    %105 = vector.broadcast %3 : vector<1x128xf32> to vector<8x128xf32>
    %106 = arith.addf %104, %105 : vector<8x128xf32>
    %cst_38 = arith.constant 0.000000e+00 : f32
    %107 = vector.broadcast %cst_38 : f32 to vector<8x128xf32>
    %108 = arith.maximumf %106, %107 : vector<8x128xf32>
    %109 = arith.truncf %108 : vector<8x128xf32> to vector<8x128xbf16>
    %cst_39 = arith.constant dense<0.000000e+00> : vector<8x128xf32>
    %110 = tpu.matmul %109, %6, %cst_39 {dimension_numbers = #tpu.dot_dimension_numbers<[1], [0], [0], [1], [0, 0, 1, 1], [], []>} : vector<8x128xbf16>, vector<128x128xbf16>, vector<8x128xf32> -> vector<8x128xf32>
    %111 = vector.broadcast %4 : vector<1x128xf32> to vector<8x128xf32>
    %112 = arith.addf %110, %111 : vector<8x128xf32>
    %113 = arith.mulf %112, %112 : vector<8x128xf32>
    %cst_40 = arith.constant dense<0.000000e+00> : vector<8xf32>
    %114 = vector.multi_reduction <add>, %113, %cst_40 [1] : vector<8x128xf32> to vector<8xf32>
    %115 = vector.shape_cast %114 : vector<8xf32> to vector<8x1xf32>
    %cst_41 = arith.constant 1.000000e-24 : f32
    %116 = vector.broadcast %cst_41 : f32 to vector<8x1xf32>
    %117 = arith.maximumf %115, %116 : vector<8x1xf32>
    %118 = math.rsqrt %117 : vector<8x1xf32>
    %cst_42 = arith.constant 1.41421354 : f32
    %119 = vector.broadcast %cst_42 : f32 to vector<8x1xf32>
    %120 = arith.mulf %118, %119 : vector<8x1xf32>
    %121 = vector.broadcast %120 : vector<8x1xf32> to vector<8x128xf32>
    %122 = arith.mulf %112, %121 : vector<8x128xf32>
    %123 = arith.truncf %122 : vector<8x128xf32> to vector<8x128xbf16>
    %cst_43 = arith.constant dense<0.000000e+00> : vector<8x8xf32>
    %124 = tpu.matmul %123, %123, %cst_43 {dimension_numbers = #tpu.dot_dimension_numbers<[1], [1], [0], [0], [0, 0, 1, 0], [], []>} : vector<8x128xbf16>, vector<8x128xbf16>, vector<8x8xf32> -> vector<8x8xf32>
    %cst_44 = arith.constant 2.000000e+00 : f32
    %125 = vector.broadcast %cst_44 : f32 to vector<8x8xf32>
    %126 = arith.subf %124, %125 : vector<8x8xf32>
    %127 = math.exp %126 : vector<8x8xf32>
    %cst_45 = arith.constant 0.000000e+00 : f32
    %128 = vector.broadcast %cst_45 : f32 to vector<8x8xf32>
    %129 = arith.select %14, %127, %128 : vector<8x8xi1>, vector<8x8xf32>
    %cst_46 = arith.constant dense<0.000000e+00> : vector<8xf32>
    %130 = vector.multi_reduction <add>, %129, %cst_46 [1] : vector<8x8xf32> to vector<8xf32>
    %131 = vector.shape_cast %130 : vector<8xf32> to vector<8x1xf32>
    %132 = math.log %131 : vector<8x1xf32>
    %133 = vector.broadcast %132 : vector<8x1xf32> to vector<8x8xf32>
    %134 = arith.subf %126, %133 : vector<8x8xf32>
    %135 = arith.mulf %18, %134 : vector<8x8xf32>
    %cst_47 = arith.constant dense<0.000000e+00> : vector<8xf32>
    %136 = vector.multi_reduction <add>, %135, %cst_47 [1] : vector<8x8xf32> to vector<8xf32>
    %137 = vector.shape_cast %136 : vector<8xf32> to vector<8x1xf32>
    %138 = arith.mulf %137, %22 : vector<8x1xf32>
    %139 = arith.addf %80, %138 : vector<8x1xf32>
    %140 = vector.shape_cast %139 : vector<8x1xf32> to vector<1x8x1xf32>
    %cst_48 = arith.constant dense<0.000000e+00> : vector<1xf32>
    %141 = vector.multi_reduction <add>, %140, %cst_48 [1, 2] : vector<1x8x1xf32> to vector<1xf32>
    %142 = vector.shape_cast %141 : vector<1xf32> to vector<1x1x1xf32>
    %143 = vector.extract %142[0, 0, 0] : f32 from vector<1x1x1xf32>
    %cst_49 = arith.constant -6.250000e-02 : f32
    %144 = arith.mulf %143, %cst_49 : f32
    %c0_50 = arith.constant 0 : index
    %145 = memref.load %arg7[%c0_50] : memref<1xf32, #tpu.memory_space<smem>>
    memref.store %144, %arg7[%c0_50] : memref<1xf32, #tpu.memory_space<smem>>
    return
  }
}

</mosaic_0001>

<llo_original>
// kernel: wcl_forward.1
$region0: #{wcl_forward.1}
  #allocation0 [shape = 'u32[]', space=smem, size = 0x4, offset = 0x4, fixed_abs, tag = 'smem constant byte address 0x4 - core index']
  #allocation1 [shape = 'u32[144,128]{1,0:T(1,128)}', space=vmem, size = 0x12000, scoped, tag = 'internal scratch']
  %s0 = inlined_call_operand.vmem [shape: bf16[8,32], index: 0, kind: input, shape index: {}]
  %s1 = inlined_call_operand.vmem [shape: bf16[8,32], index: 1, kind: input, shape index: {}]
  %s2 = inlined_call_operand.vmem [shape: bf16[32,128], index: 2, kind: input, shape index: {}]
  %s3 = inlined_call_operand.vmem [shape: bf16[128,128], index: 3, kind: input, shape index: {}]
  %s4 = inlined_call_operand.vmem [shape: f32[4,128], index: 4, kind: input, shape index: {}]
  %s5 = inlined_call_operand.vmem [shape: s32[1,8], index: 5, kind: input, shape index: {}]
  %s6 = inlined_call_operand.vmem [shape: s32[8,1], index: 6, kind: input, shape index: {}]
  %s7 = inlined_call_operand.hbm [shape: f32[1], index: 7, kind: output, shape index: {}]
  %s8 = sld [smem:[#allocation0]]
  $region38: #{wcl_forward.1} parent=0
    _
  %s10 = ssub.s32 1, %s8
  %s11 = scalar_select 0, %s10, %s8
  $region1: #{wcl_forward.1} parent=0
    #allocation2 [shape = 'u8[512]{0}', space=smem, size = 0x200, scoped, tag = 'output window, operand 0, single buffered']
    #allocation3 [shape = 's32[1]{0}', space=sflag, size = 0x4, scoped, tag = 'scoped memory for wcl_forward.1']
    %12 = vsyncpa [#allocation3], 0
    // Predicated region
    $region2: #{wcl_forward.1} parent=1 // pred_check
      _
    $region3: #{wcl_forward.1} parent=1 // pred_check_branch
      %14 = sbr.rel (0) target = $region5
    $region4: #{wcl_forward.1} parent=1 // pred_region
      _
    $region5: #{wcl_forward.1} parent=1 // pred_fallthru
      _
    // Predicated region
    $region6: #{wcl_forward.1} parent=1 // pred_check
      _
    $region7: #{wcl_forward.1} parent=1 // pred_check_branch
      %16 = sbr.rel (0) target = $region9
    $region8: #{wcl_forward.1} parent=1 // pred_region
      _
    $region9: #{wcl_forward.1} parent=1 // pred_fallthru
      _
    // Predicated region
    $region10: #{wcl_forward.1} parent=1 // pred_check
      _
    $region11: #{wcl_forward.1} parent=1 // pred_check_branch
      %18 = sbr.rel (0) target = $region13
    $region12: #{wcl_forward.1} parent=1 // pred_region
      _
    $region13: #{wcl_forward.1} parent=1 // pred_fallthru
      _
    // Predicated region
    $region14: #{wcl_forward.1} parent=1 // pred_check
      _
    $region15: #{wcl_forward.1} parent=1 // pred_check_branch
      %20 = sbr.rel (0) target = $region17
    $region16: #{wcl_forward.1} parent=1 // pred_region
      _
    $region17: #{wcl_forward.1} parent=1 // pred_fallthru
      _
    // Predicated region
    $region18: #{wcl_forward.1} parent=1 // pred_check
      _
    $region19: #{wcl_forward.1} parent=1 // pred_check_branch
      %22 = sbr.rel (0) target = $region21
    $region20: #{wcl_forward.1} parent=1 // pred_region
      _
    $region21: #{wcl_forward.1} parent=1 // pred_fallthru
      _
    // Predicated region
    $region22: #{wcl_forward.1} parent=1 // pred_check
      _
    $region23: #{wcl_forward.1} parent=1 // pred_check_branch
      %24 = sbr.rel (0) target = $region25
    $region24: #{wcl_forward.1} parent=1 // pred_region
      _
    $region25: #{wcl_forward.1} parent=1 // pred_fallthru
      _
    // Predicated region
    $region26: #{wcl_forward.1} parent=1 // pred_check
      _
    $region27: #{wcl_forward.1} parent=1 // pred_check_branch
      %26 = sbr.rel (0) target = $region29
    $region28: #{wcl_forward.1} parent=1 // pred_region
      _
    $region29: #{wcl_forward.1} parent=1 // pred_fallthru
      _
    %v28 = vld [vmem:[%s4] sm:$0xf]
    %v29 = vld [vmem:[%s2] sm:$0xf]
    %v30 = vld [vmem:[%s2 + $0x4] sm:$0xf]
    %v31 = vld [vmem:[%s2 + $0x8] sm:$0xf]
    %v32 = vld [vmem:[%s2 + $0xc] sm:$0xf]
    %v33 = vld [vmem:[%s3] sm:$0xf]
    %v34 = vld [vmem:[%s3 + $0x4] sm:$0xf]
    %v35 = vld [vmem:[%s3 + $0x8] sm:$0xf]
    %v36 = vld [vmem:[%s3 + $0xc] sm:$0xf]
    %v37 = vld [vmem:[%s3 + $0x10] sm:$0xf]
    %v38 = vld [vmem:[%s3 + $0x14] sm:$0xf]
    %v39 = vld [vmem:[%s3 + $0x18] sm:$0xf]
    %v40 = vld [vmem:[%s3 + $0x1c] sm:$0xf]
    %v41 = vld [vmem:[%s3 + $0x20] sm:$0xf]
    %v42 = vld [vmem:[%s3 + $0x24] sm:$0xf]
    %v43 = vld [vmem:[%s3 + $0x28] sm:$0xf]
    %v44 = vld [vmem:[%s3 + $0x2c] sm:$0xf]
    %v45 = vld [vmem:[%s3 + $0x30] sm:$0xf]
    %v46 = vld [vmem:[%s3 + $0x34] sm:$0xf]
    %v47 = vld [vmem:[%s3 + $0x38] sm:$0xf]
    %v48 = vld [vmem:[%s3 + $0x3c] sm:$0xf]
    %v49 = vld [vmem:[%s6] sm:$0xff]
    %v50 = vld [vmem:[%s5] sm:$0x1]
    %51 = vset.pattern.permute.xlu0 0
    %52 = vperm.xlu0 %51, %v49
    %v53 = vpop.permute.xlu0 %52
    %v54 = vlaneseq
    %v55 = vshrl.u32 %v54, 7
    %v56 = vsub.s32 0, %v55
    %v57 = vrot.slane %v50, %v56
    %vm58 = vcmp.eq.s32.totalorder %v53, %v57
    %v59 = vlaneseq
    %v60 = vshrl.u32 %v59, 7
    %v61 = vlaneseq
    %v62 = vand.u32 %v61, 127
    %vm63 = vcmp.ne.s32.totalorder %v60, %v62
    %vm64 = vmand %vm58, %vm63
    %v65 = vsel %vm64, 1.0, 0.0
    %vm66 = vcmask 64512
    %v67 = vsel %vm66, %v65, 0.0
    %68 = vadd.xlane.f32.xlu0 %v67
    %v69 = vpop.xlane.xlu0 %68
    %v70 = vrcp.pop %v69
    %v71 = vmul.f32 1.0, %v70
    %v72 = vld [vmem:[%s0] sm:$0xf]
    %v73 = vlaneseq
    %v74 = vshrl.u32 %v73, 7
    %v75 = vsub.s32 0, %v74
    %v76 = vrot.slane %v28, %v75
    %v81 = vunpack.c.l.b16 %v29
    %v82 = vunpack.c.l.b16 %v30
    %v83 = vunpack.c.l.b16 %v31
    %v84 = vunpack.c.l.b16 %v32
    %v85 = vpack.c.b16 %v82, %v81
    %v86 = vpack.c.b16 %v84, %v83
    %vm89 = vcmask 261120
    %v91 = vsel %vm89, %v72, 0
    %93 = vmatprep.subr.bf16.mxu0 0
    %94 = vmatpush1.bf16.msra.mxu0 %v85
    %95 = vmatprep.subr.bf16.mxu0 0
    %96 = vmatpush1.bf16.msra.mxu0 %v86
    %97 = vmatprep.subr.bf16.mxu0 0
    %98 = vmatpush1.bf16.msra.mxu0 0
    %99 = vmatprep.subr.bf16.mxu0 0
    %100 = vmatpush1.bf16.msra.mxu0 0
    %101 = vmatprep.subr.bf16.mxu0 0
    %102 = vmatpush1.bf16.msra.mxu0 0
    %103 = vmatprep.subr.bf16.mxu0 0
    %104 = vmatpush1.bf16.msra.mxu0 0
    %105 = vmatprep.subr.bf16.mxu0 0
    %106 = vmatpush1.bf16.msra.mxu0 0
    %107 = vmatprep.subr.bf16.mxu0 0
    %108 = vmatpush1.bf16.msra.mxu0 0
    %109 = vmatprep.subr.bf16.mxu0 0
    %110 = vmatpush1.bf16.msra.mxu0 0
    %111 = vmatprep.subr.bf16.mxu0 0
    %112 = vmatpush1.bf16.msra.mxu0 0
    %113 = vmatprep.subr.bf16.mxu0 0
    %114 = vmatpush1.bf16.msra.mxu0 0
    %115 = vmatprep.subr.bf16.mxu0 0
    %116 = vmatpush1.bf16.msra.mxu0 0
    %117 = vmatprep.subr.bf16.mxu0 0
    %118 = vmatpush1.bf16.msra.mxu0 0
    %119 = vmatprep.subr.bf16.mxu0 0
    %120 = vmatpush1.bf16.msra.mxu0 0
    %121 = vmatprep.subr.bf16.mxu0 0
    %122 = vmatpush1.bf16.msra.mxu0 0
    %123 = vmatprep.subr.bf16.mxu0 0
    %124 = vmatpush1.bf16.msra.mxu0 0
    %125 = vmatprep.mubr.bf16.mxu0 0
    %126 = vmatmul.mubr.bf16.gmra.mrb[0].mxu0 %v91
    %v127 = vpop.f32.mrb[0].mxu0
    %v128 = vadd.f32 %v76, %v127
    %v129 = vpop.f32.mrb[0].mxu0
    %v130 = vpop.f32.mrb[0].mxu0
    %v131 = vpop.f32.mrb[0].mxu0
    %132 = vdwg.mxu0
    %v133 = vrot.slane %v128, 4
    %v134 = vadd.f32 %v128, %v133
    %v135 = vrot.slane %v134, 2
    %v136 = vadd.f32 %v134, %v135
    %v137 = vrot.slane %v136, 1
    %v138 = vadd.f32 %v136, %v137
    %v139 = vrcp.pop 8.0
    %v140 = vmul.f32 %v138, %v139
    %v141 = vsub.f32 %v128, %v140
    %v142 = vmul.f32 %v141, %v141
    %v143 = vrot.slane %v142, 4
    %v144 = vadd.f32 %v142, %v143
    %v145 = vrot.slane %v144, 2
    %v146 = vadd.f32 %v144, %v145
    %v147 = vrot.slane %v146, 1
    %v148 = vadd.f32 %v146, %v147
    %v149 = vmul.f32 %v148, %v139
    %v150 = vadd.f32 %v149, 1e-05
    %v151 = vrsqrt.pop %v150
    %v152 = vmul.f32 %v141, %v151
    %v153 = vlaneseq
    %v154 = vshrl.u32 %v153, 7
    %v155 = vsub.s32 1, %v154
    %v156 = vrot.slane %v28, %v155
    %v157 = vmul.f32 %v152, %v156
    %v158 = vlaneseq
    %v159 = vshrl.u32 %v158, 7
    %v160 = vsub.s32 2, %v159
    %v161 = vrot.slane %v28, %v160
    %v162 = vadd.f32 %v157, %v161
    %v163 = vmax.f32 %v162, 0.0
    %v164 = vpack.c.bf16 %v163, %v163
    %v165 = vlaneseq
    %v166 = vshrl.u32 %v165, 7
    %v167 = vsub.s32 3, %v166
    %v168 = vrot.slane %v28, %v167
    %v185 = vunpack.c.l.b16 %v33
    %v186 = vunpack.c.l.b16 %v34
    %v187 = vunpack.c.l.b16 %v35
    %v188 = vunpack.c.l.b16 %v36
    %v189 = vunpack.c.l.b16 %v37
    %v190 = vunpack.c.l.b16 %v38
    %v191 = vunpack.c.l.b16 %v39
    %v192 = vunpack.c.l.b16 %v40
    %v193 = vunpack.c.l.b16 %v41
    %v194 = vunpack.c.l.b16 %v42
    %v195 = vunpack.c.l.b16 %v43
    %v196 = vunpack.c.l.b16 %v44
    %v197 = vunpack.c.l.b16 %v45
    %v198 = vunpack.c.l.b16 %v46
    %v199 = vunpack.c.l.b16 %v47
    %v200 = vunpack.c.l.b16 %v48
    %v201 = vpack.c.b16 %v186, %v185
    %v202 = vpack.c.b16 %v188, %v187
    %v203 = vpack.c.b16 %v190, %v189
    %v204 = vpack.c.b16 %v192, %v191
    %v205 = vpack.c.b16 %v194, %v193
    %v206 = vpack.c.b16 %v196, %v195
    %v207 = vpack.c.b16 %v198, %v197
    %v208 = vpack.c.b16 %v200, %v199
    %217 = vmatprep.subr.bf16.mxu0 0
    %218 = vmatpush1.bf16.msra.mxu0 %v201
    %219 = vmatprep.subr.bf16.mxu0 0
    %220 = vmatpush1.bf16.msra.mxu0 %v202
    %221 = vmatprep.subr.bf16.mxu0 0
    %222 = vmatpush1.bf16.msra.mxu0 %v203
    %223 = vmatprep.subr.bf16.mxu0 0
    %224 = vmatpush1.bf16.msra.mxu0 %v204
    %225 = vmatprep.subr.bf16.mxu0 0
    %226 = vmatpush1.bf16.msra.mxu0 %v205
    %227 = vmatprep.subr.bf16.mxu0 0
    %228 = vmatpush1.bf16.msra.mxu0 %v206
    %229 = vmatprep.subr.bf16.mxu0 0
    %230 = vmatpush1.bf16.msra.mxu0 %v207
    %231 = vmatprep.subr.bf16.mxu0 0
    %232 = vmatpush1.bf16.msra.mxu0 %v208
    %233 = vmatprep.subr.bf16.mxu0 0
    %234 = vmatpush1.bf16.msra.mxu0 0
    %235 = vmatprep.subr.bf16.mxu0 0
    %236 = vmatpush1.bf16.msra.mxu0 0
    %237 = vmatprep.subr.bf16.mxu0 0
    %238 = vmatpush1.bf16.msra.mxu0 0
    %239 = vmatprep.subr.bf16.mxu0 0
    %240 = vmatpush1.bf16.msra.mxu0 0
    %241 = vmatprep.subr.bf16.mxu0 0
    %242 = vmatpush1.bf16.msra.mxu0 0
    %243 = vmatprep.subr.bf16.mxu0 0
    %244 = vmatpush1.bf16.msra.mxu0 0
    %245 = vmatprep.subr.bf16.mxu0 0
    %246 = vmatpush1.bf16.msra.mxu0 0
    %247 = vmatprep.subr.bf16.mxu0 0
    %248 = vmatpush1.bf16.msra.mxu0 0
    %249 = vmatprep.mubr.bf16.mxu0 0
    %250 = vmatmul.mubr.bf16.gmra.mrb[0].mxu0 %v164
    %v251 = vpop.f32.mrb[0].mxu0
    %v252 = vadd.f32 %v168, %v251
    %v253 = vpop.f32.mrb[0].mxu0
    %v254 = vpop.f32.mrb[0].mxu0
    %v255 = vpop.f32.mrb[0].mxu0
    %256 = vdwg.mxu0
    %v257 = vmul.f32 %v252, %v252
    %258 = vadd.xlane.f32.xlu0 %v257
    %v259 = vpop.xlane.xlu0 %258
    %v260 = vmax.f32 %v259, 1e-24
    %v261 = vrsqrt.pop %v260
    %v262 = vmul.f32 %v261, 1.4142135
    %v263 = vmul.f32 %v252, %v262
    %v264 = vpack.c.bf16 %v263, %v263
    %265 = vmatprep.subr.bf16.mxu0 0
    %266 = vmatpush1.bf16.xpose.msra.mxu0 %v264
    %267 = vmatprep.subr.bf16.mxu0 0
    %268 = vmatpush1.bf16.xpose.msra.mxu0 0
    %269 = vmatprep.subr.bf16.mxu0 0
    %270 = vmatpush1.bf16.xpose.msra.mxu0 0
    %271 = vmatprep.subr.bf16.mxu0 0
    %272 = vmatpush1.bf16.xpose.msra.mxu0 0
    %273 = vmatprep.subr.bf16.mxu0 0
    %274 = vmatpush1.bf16.xpose.msra.mxu0 0
    %275 = vmatprep.subr.bf16.mxu0 0
    %276 = vmatpush1.bf16.xpose.msra.mxu0 0
    %277 = vmatprep.subr.bf16.mxu0 0
    %278 = vmatpush1.bf16.xpose.msra.mxu0 0
    %279 = vmatprep.subr.bf16.mxu0 0
    %280 = vmatpush1.bf16.xpose.msra.mxu0 0
    %281 = vmatprep.subr.bf16.mxu0 0
    %282 = vmatpush1.bf16.xpose.msra.mxu0 0
    %283 = vmatprep.subr.bf16.mxu0 0
    %284 = vmatpush1.bf16.xpose.msra.mxu0 0
    %285 = vmatprep.subr.bf16.mxu0 0
    %286 = vmatpush1.bf16.xpose.msra.mxu0 0
    %287 = vmatprep.subr.bf16.mxu0 0
    %288 = vmatpush1.bf16.xpose.msra.mxu0 0
    %289 = vmatprep.subr.bf16.mxu0 0
    %290 = vmatpush1.bf16.xpose.msra.mxu0 0
    %291 = vmatprep.subr.bf16.mxu0 0
    %292 = vmatpush1.bf16.xpose.msra.mxu0 0
    %293 = vmatprep.subr.bf16.mxu0 0
    %294 = vmatpush1.bf16.xpose.msra.mxu0 0
    %295 = vmatprep.subr.bf16.mxu0 0
    %296 = vmatpush1.bf16.xpose.msra.mxu0 0
    %297 = vmatprep.mubr.bf16.mxu0 0
    %298 = vmatmul.mubr.bf16.gmra.mrb[0].mxu0 %v264
    %v299 = vpop.f32.mrb[0].mxu0
    %v300 = vadd.f32 0.0, %v299
    %v301 = vpop.f32.mrb[0].mxu0
    %v302 = vpop.f32.mrb[0].mxu0
    %v303 = vpop.f32.mrb[0].mxu0
    %304 = vdwg.mxu0
    %v305 = vsub.f32 %v300, 2.0
    %v306 = vmul.f32 %v305, 1.442695
    %v307 = vpow.pop %v306
    %v308 = vsel %vm63, %v307, 0.0
    %v309 = vsel %vm66, %v308, 0.0
    %310 = vadd.xlane.f32.xlu0 %v309
    %v311 = vpop.xlane.xlu0 %310
    %v312 = vlog2.pop %v311
    %v313 = vmul.f32 %v312, 0.6931472
    %v314 = vsub.f32 %v305, %v313
    %v315 = vmul.f32 %v65, %v314
    %v316 = vsel %vm66, %v315, 0.0
    %317 = vadd.xlane.f32.xlu0 %v316
    %v318 = vpop.xlane.xlu0 %317
    %v319 = vmul.f32 %v318, %v71
    %v320 = vld [vmem:[%s1] sm:$0xf]
    %v322 = vsel %vm89, %v320, 0
    %324 = vmatprep.subr.bf16.mxu0 0
    %325 = vmatpush1.bf16.msra.mxu0 %v85
    %326 = vmatprep.subr.bf16.mxu0 0
    %327 = vmatpush1.bf16.msra.mxu0 %v86
    %328 = vmatprep.subr.bf16.mxu0 0
    %329 = vmatpush1.bf16.msra.mxu0 0
    %330 = vmatprep.subr.bf16.mxu0 0
    %331 = vmatpush1.bf16.msra.mxu0 0
    %332 = vmatprep.subr.bf16.mxu0 0
    %333 = vmatpush1.bf16.msra.mxu0 0
    %334 = vmatprep.subr.bf16.mxu0 0
    %335 = vmatpush1.bf16.msra.mxu0 0
    %336 = vmatprep.subr.bf16.mxu0 0
    %337 = vmatpush1.bf16.msra.mxu0 0
    %338 = vmatprep.subr.bf16.mxu0 0
    %339 = vmatpush1.bf16.msra.mxu0 0
    %340 = vmatprep.subr.bf16.mxu0 0
    %341 = vmatpush1.bf16.msra.mxu0 0
    %342 = vmatprep.subr.bf16.mxu0 0
    %343 = vmatpush1.bf16.msra.mxu0 0
    %344 = vmatprep.subr.bf16.mxu0 0
    %345 = vmatpush1.bf16.msra.mxu0 0
    %346 = vmatprep.subr.bf16.mxu0 0
    %347 = vmatpush1.bf16.msra.mxu0 0
    %348 = vmatprep.subr.bf16.mxu0 0
    %349 = vmatpush1.bf16.msra.mxu0 0
    %350 = vmatprep.subr.bf16.mxu0 0
    %351 = vmatpush1.bf16.msra.mxu0 0
    %352 = vmatprep.subr.bf16.mxu0 0
    %353 = vmatpush1.bf16.msra.mxu0 0
    %354 = vmatprep.subr.bf16.mxu0 0
    %355 = vmatpush1.bf16.msra.mxu0 0
    %356 = vmatprep.mubr.bf16.mxu0 0
    %357 = vmatmul.mubr.bf16.gmra.mrb[0].mxu0 %v322
    %v358 = vpop.f32.mrb[0].mxu0
    %v359 = vadd.f32 %v76, %v358
    %v360 = vpop.f32.mrb[0].mxu0
    %v361 = vpop.f32.mrb[0].mxu0
    %v362 = vpop.f32.mrb[0].mxu0
    %363 = vdwg.mxu0
    %v364 = vrot.slane %v359, 4
    %v365 = vadd.f32 %v359, %v364
    %v366 = vrot.slane %v365, 2
    %v367 = vadd.f32 %v365, %v366
    %v368 = vrot.slane %v367, 1
    %v369 = vadd.f32 %v367, %v368
    %v370 = vmul.f32 %v369, %v139
    %v371 = vsub.f32 %v359, %v370
    %v372 = vmul.f32 %v371, %v371
    %v373 = vrot.slane %v372, 4
    %v374 = vadd.f32 %v372, %v373
    %v375 = vrot.slane %v374, 2
    %v376 = vadd.f32 %v374, %v375
    %v377 = vrot.slane %v376, 1
    %v378 = vadd.f32 %v376, %v377
    %v379 = vmul.f32 %v378, %v139
    %v380 = vadd.f32 %v379, 1e-05
    %v381 = vrsqrt.pop %v380
    %v382 = vmul.f32 %v371, %v381
    %v383 = vmul.f32 %v382, %v156
    %v384 = vadd.f32 %v383, %v161
    %v385 = vmax.f32 %v384, 0.0
    %v386 = vpack.c.bf16 %v385, %v385
    %387 = vmatprep.subr.bf16.mxu0 0
    %388 = vmatpush1.bf16.msra.mxu0 %v201
    %389 = vmatprep.subr.bf16.mxu0 0
    %390 = vmatpush1.bf16.msra.mxu0 %v202
    %391 = vmatprep.subr.bf16.mxu0 0
    %392 = vmatpush1.bf16.msra.mxu0 %v203
    %393 = vmatprep.subr.bf16.mxu0 0
    %394 = vmatpush1.bf16.msra.mxu0 %v204
    %395 = vmatprep.subr.bf16.mxu0 0
    %396 = vmatpush1.bf16.msra.mxu0 %v205
    %397 = vmatprep.subr.bf16.mxu0 0
    %398 = vmatpush1.bf16.msra.mxu0 %v206
    %399 = vmatprep.subr.bf16.mxu0 0
    %400 = vmatpush1.bf16.msra.mxu0 %v207
    %401 = vmatprep.subr.bf16.mxu0 0
    %402 = vmatpush1.bf16.msra.mxu0 %v208
    %403 = vmatprep.subr.bf16.mxu0 0
    %404 = vmatpush1.bf16.msra.mxu0 0
    %405 = vmatprep.subr.bf16.mxu0 0
    %406 = vmatpush1.bf16.msra.mxu0 0
    %407 = vmatprep.subr.bf16.mxu0 0
    %408 = vmatpush1.bf16.msra.mxu0 0
    %409 = vmatprep.subr.bf16.mxu0 0
    %410 = vmatpush1.bf16.msra.mxu0 0
    %411 = vmatprep.subr.bf16.mxu0 0
    %412 = vmatpush1.bf16.msra.mxu0 0
    %413 = vmatprep.subr.bf16.mxu0 0
    %414 = vmatpush1.bf16.msra.mxu0 0
    %415 = vmatprep.subr.bf16.mxu0 0
    %416 = vmatpush1.bf16.msra.mxu0 0
    %417 = vmatprep.subr.bf16.mxu0 0
    %418 = vmatpush1.bf16.msra.mxu0 0
    %419 = vmatprep.mubr.bf16.mxu0 0
    %420 = vmatmul.mubr.bf16.gmra.mrb[0].mxu0 %v386
    %v421 = vpop.f32.mrb[0].mxu0
    %v422 = vadd.f32 %v168, %v421
    %v423 = vpop.f32.mrb[0].mxu0
    %v424 = vpop.f32.mrb[0].mxu0
    %v425 = vpop.f32.mrb[0].mxu0
    %426 = vdwg.mxu0
    %v427 = vmul.f32 %v422, %v422
    %428 = vadd.xlane.f32.xlu0 %v427
    %v429 = vpop.xlane.xlu0 %428
    %v430 = vmax.f32 %v429, 1e-24
    %v431 = vrsqrt.pop %v430
    %v432 = vmul.f32 %v431, 1.4142135
    %v433 = vmul.f32 %v422, %v432
    %v434 = vpack.c.bf16 %v433, %v433
    %435 = vmatprep.subr.bf16.mxu0 0
    %436 = vmatpush1.bf16.xpose.msra.mxu0 %v434
    %437 = vmatprep.subr.bf16.mxu0 0
    %438 = vmatpush1.bf16.xpose.msra.mxu0 0
    %439 = vmatprep.subr.bf16.mxu0 0
    %440 = vmatpush1.bf16.xpose.msra.mxu0 0
    %441 = vmatprep.subr.bf16.mxu0 0
    %442 = vmatpush1.bf16.xpose.msra.mxu0 0
    %443 = vmatprep.subr.bf16.mxu0 0
    %444 = vmatpush1.bf16.xpose.msra.mxu0 0
    %445 = vmatprep.subr.bf16.mxu0 0
    %446 = vmatpush1.bf16.xpose.msra.mxu0 0
    %447 = vmatprep.subr.bf16.mxu0 0
    %448 = vmatpush1.bf16.xpose.msra.mxu0 0
    %449 = vmatprep.subr.bf16.mxu0 0
    %450 = vmatpush1.bf16.xpose.msra.mxu0 0
    %451 = vmatprep.subr.bf16.mxu0 0
    %452 = vmatpush1.bf16.xpose.msra.mxu0 0
    %453 = vmatprep.subr.bf16.mxu0 0
    %454 = vmatpush1.bf16.xpose.msra.mxu0 0
    %455 = vmatprep.subr.bf16.mxu0 0
    %456 = vmatpush1.bf16.xpose.msra.mxu0 0
    %457 = vmatprep.subr.bf16.mxu0 0
    %458 = vmatpush1.bf16.xpose.msra.mxu0 0
    %459 = vmatprep.subr.bf16.mxu0 0
    %460 = vmatpush1.bf16.xpose.msra.mxu0 0
    %461 = vmatprep.subr.bf16.mxu0 0
    %462 = vmatpush1.bf16.xpose.msra.mxu0 0
    %463 = vmatprep.subr.bf16.mxu0 0
    %464 = vmatpush1.bf16.xpose.msra.mxu0 0
    %465 = vmatprep.subr.bf16.mxu0 0
    %466 = vmatpush1.bf16.xpose.msra.mxu0 0
    %467 = vmatprep.mubr.bf16.mxu0 0
    %468 = vmatmul.mubr.bf16.gmra.mrb[0].mxu0 %v434
    %v469 = vpop.f32.mrb[0].mxu0
    %v470 = vadd.f32 0.0, %v469
    %v471 = vpop.f32.mrb[0].mxu0
    %v472 = vpop.f32.mrb[0].mxu0
    %v473 = vpop.f32.mrb[0].mxu0
    %474 = vdwg.mxu0
    %v475 = vsub.f32 %v470, 2.0
    %v476 = vmul.f32 %v475, 1.442695
    %v477 = vpow.pop %v476
    %v478 = vsel %vm63, %v477, 0.0
    %v479 = vsel %vm66, %v478, 0.0
    %480 = vadd.xlane.f32.xlu0 %v479
    %v481 = vpop.xlane.xlu0 %480
    %v482 = vlog2.pop %v481
    %v483 = vmul.f32 %v482, 0.6931472
    %v484 = vsub.f32 %v475, %v483
    %v485 = vmul.f32 %v65, %v484
    %v486 = vsel %vm66, %v485, 0.0
    %487 = vadd.xlane.f32.xlu0 %v486
    %v488 = vpop.xlane.xlu0 %487
    %v489 = vmul.f32 %v488, %v71
    %v490 = vadd.f32 %v319, %v489
    %vm491 = vcmask 7168
    %v492 = vsel %vm491, %v490, 0.0
    %493 = vadd.xlane.f32.xlu0 %v492
    %v494 = vpop.xlane.xlu0 %493
    %v495 = vrot.slane %v494, 4
    %v496 = vadd.f32 %v494, %v495
    %v497 = vrot.slane %v496, 2
    %v498 = vadd.f32 %v496, %v497
    %v499 = vrot.slane %v498, 1
    %v500 = vadd.f32 %v498, %v499
    %s501 = vtos %v500
    %s502 = smul.f32 %s501, -0.0625
    %s503 = scalar_lea.smem [#allocation2], 0
    %504 = sst [smem:[%s503]] %s502
    // Predicated region
    $region30: #{wcl_forward.1} parent=1 // pred_check
      _
    $region31: #{wcl_forward.1} parent=1 // pred_check_branch
      %506 = sbr.rel (0) target = $region33
    $region32: #{wcl_forward.1} parent=1 // pred_region
      %s508 = ssub.s32 16, 16
      %509 = vsyncadd [#allocation3], %s508
      %512 = dma.smem_to_hbm [#allocation2], 16, %s7, [#allocation3]
    $region33: #{wcl_forward.1} parent=1 // pred_fallthru
      _
    // Predicated region
    $region34: #{wcl_forward.1} parent=1 // pred_check
      _
    $region35: #{wcl_forward.1} parent=1 // pred_check_branch
      %514 = sbr.rel (0) target = $region37
    $region36: #{wcl_forward.1} parent=1 // pred_region
      %515 = dma.done [#allocation3], 16
    $region37: #{wcl_forward.1} parent=1 // pred_fallthru
      _
    %516 = sfence
    %517 = vsyncpa [#allocation3], 1

</llo_original>
